<compile_context>
chip_gen: v6e
topology: v6e:2x2x1
jax: 0.10.0
libtpu: 0.0.40
codegen_flags: <defaults>
</compile_context>

<pallas_src>
import jax
import jax.numpy as jnp
from jax.experimental import pallas as pl
from jax.experimental.pallas import tpu as pltpu

_LANE = 128
_TARGET_X_BLOCK_BYTES = 2 * 1024 * 1024  # ~2 MiB of x per grid step
_MAX_BATCH_BLOCK = 8                     # cap on static unroll of kernel body


def _proto_cos_kernel(x_ref, pn_ref, o_ref):
    # x_ref:  (Bblk, C, thw) latent columns for Bblk batch elems / one spatial tile
    # pn_ref: (P, C)         L2-normalized prototype vectors (resident across grid)
    # o_ref:  (Bblk, P, thw) cosine similarities (f32)
    pn = pn_ref[...]
    bblk = x_ref.shape[0]
    for b in range(bblk):  # small static unroll (<= _MAX_BATCH_BLOCK)
        xd = x_ref[b]                                     # (C, thw), native dtype
        xf = xd.astype(jnp.float32)                       # f32 for norm math (v5e VPU/EUP)
        # Squared L2 norm of each spatial column over channels (sublane reduction).
        sq = jnp.sum(xf * xf, axis=0, keepdims=True)      # (1, thw)
        # rsqrt on the EUP; clamping ||x||^2 at eps^2 matches F.normalize's
        # clamping of ||x|| at eps (eps = 1e-12).
        inv_norm = jax.lax.rsqrt(jnp.maximum(sq, 1e-24))  # (1, thw)
        # (P, C) @ (C, thw) -> (P, thw) on the MXU, f32 accumulation.
        dots = jax.lax.dot_general(
            pn, xd, (((1,), (0,)), ((), ())), preferred_element_type=jnp.float32
        )
        # Scale the small (P, thw) result instead of the (C, thw) input.
        o_ref[b] = (dots * inv_norm).astype(o_ref.dtype)


def _choose_spatial_tile(HW, C, itemsize):
    """Returns (thw, hw_pad). No padding when HW fits one tile or is a lane multiple."""
    max_cols = max(_LANE, (_TARGET_X_BLOCK_BYTES // (C * itemsize)) // _LANE * _LANE)
    if HW <= max_cols:
        return HW, HW  # block dim == full array dim: exempt from 128-divisibility
    hw_pad = pl.cdiv(HW, _LANE) * _LANE
    nblk = hw_pad // _LANE
    best = 1
    for d in range(1, nblk + 1):
        if nblk % d == 0 and d * _LANE <= max_cols:
            best = d
    return best * _LANE, hw_pad


def _choose_batch_block(B, per_batch_bytes, n_spatial_tiles):
    """Largest divisor of B whose x-block fits the target; keep >=2 grid steps."""
    best = 1
    for d in range(1, min(B, _MAX_BATCH_BLOCK) + 1):
        if B % d == 0 and d * per_batch_bytes <= _TARGET_X_BLOCK_BYTES:
            best = d
    if n_spatial_tiles == 1 and best == B and B >= 2:
        # Don't collapse the whole grid to a single step (megacore / v7x 2 TCs).
        smaller = [d for d in range(1, B) if B % d == 0 and d <= _MAX_BATCH_BLOCK]
        if smaller:
            best = max(smaller)
    return best


def prototype_layer_forward(x, prototype_tensors):
    """x: (B, C, H, W) NCHW (f32 or bf16); prototype_tensors: (P, C, 1, 1)."""
    B, C, H, W = x.shape
    P = prototype_tensors.shape[0]
    assert prototype_tensors.shape[1] == C
    assert prototype_tensors.shape[2] == 1 and prototype_tensors.shape[3] == 1
    HW = H * W

    # Hoist prototype normalization out of the grid loop (tiny tensor, once).
    protos = prototype_tensors.reshape(P, C).astype(jnp.float32)
    p_sq = jnp.sum(protos * protos, axis=-1, keepdims=True)
    pn = protos * jax.lax.rsqrt(jnp.maximum(p_sq, 1e-24))
    # Feed the MXU operands in matching dtype; keep bf16 activations bf16.
    if x.dtype == jnp.bfloat16:
        pn = pn.astype(jnp.bfloat16)

    # Native layout: collapse spatial dims only -> (B, C, HW). No transposes,
    # no dtype cast of x in the wrapper.
    x3 = x.reshape(B, C, HW)
    itemsize = jnp.dtype(x3.dtype).itemsize

    thw, hw_pad = _choose_spatial_tile(HW, C, itemsize)
    if hw_pad != HW:
        # Minimal padding (< 128 columns); padded columns are sliced away below.
        x3 = jnp.pad(x3, ((0, 0), (0, 0), (0, hw_pad - HW)))
    n_spatial = hw_pad // thw

    bblk = _choose_batch_block(B, C * thw * itemsize, n_spatial)
    grid = (B // bblk, n_spatial)

    # VMEM budget: double-buffered x + out blocks, plus resident prototypes.
    block_bytes = 2 * (bblk * C * thw * itemsize + bblk * P * thw * 4) + 2 * P * C * 4
    vmem_limit = int(min(64 * 1024 * 1024, max(4 * block_bytes, 16 * 1024 * 1024)))

    cost = pl.CostEstimate(
        flops=2 * B * hw_pad * P * C + 2 * B * hw_pad * C,
        transcendentals=B * hw_pad,
        bytes_accessed=itemsize * B * C * hw_pad + 4 * B * P * hw_pad + 4 * P * C,
    )

    out3 = pl.pallas_call(
        _proto_cos_kernel,
        out_shape=jax.ShapeDtypeStruct((B, P, hw_pad), jnp.float32),
        grid_spec=pl.GridSpec(
            grid=grid,
            in_specs=[
                pl.BlockSpec((bblk, C, thw), lambda b, j: (b, 0, j)),  # x tile
                pl.BlockSpec((P, C), lambda b, j: (0, 0)),             # prototypes
            ],
            out_specs=pl.BlockSpec((bblk, P, thw), lambda b, j: (b, 0, j)),
        ),
        compiler_params=pltpu.CompilerParams(
            dimension_semantics=("parallel", "parallel"),
            vmem_limit_bytes=vmem_limit,
        ),
        cost_estimate=cost,
    )(x3, pn)

    if hw_pad != HW:
        out3 = out3[:, :, :HW]
    prototype_activations = out3.reshape(B, P, H, W)
    return {
        "prototype_activations": prototype_activations,
        "upsampled_activation": None,  # with_fa defaults to False in __init__
    }


def _reference_forward(x, prototype_tensors):
    """Pure-JAX reference of the cosine activation for verification."""
    B, C, H, W = x.shape
    P = prototype_tensors.shape[0]
    xr = jnp.transpose(x, (0, 2, 3, 1)).reshape(-1, C).astype(jnp.float32)
    pr = prototype_tensors.reshape(P, C).astype(jnp.float32)
    xn = xr / jnp.maximum(jnp.linalg.norm(xr, axis=-1, keepdims=True), 1e-12)
    pn = pr / jnp.maximum(jnp.linalg.norm(pr, axis=-1, keepdims=True), 1e-12)
    out = xn @ pn.T
    return jnp.transpose(out.reshape(B, H, W, P), (0, 3, 1, 2))


if __name__ == "__main__":
    key = jax.random.PRNGKey(0)
    k_x, k_p = jax.random.split(key)

    # Small shapes consistent with the module:
    #   num_classes=2, 5 prototypes per class -> num_prototypes=10
    #   latent_channels=32, prototype_dimension=(1,1), latent map 16x16, batch=2
    num_classes = 2
    num_prototypes = 10
    latent_channels = 32
    B, H, W = 2, 16, 16

    # prototype_class_identity buffer (not used in forward, built for completeness)
    protos_per_class = num_prototypes // num_classes
    proto_class_identity = jnp.zeros((num_prototypes, num_classes), jnp.float32)
    proto_class_identity = proto_class_identity.at[
        jnp.arange(num_prototypes), jnp.arange(num_prototypes) // protos_per_class
    ].set(1.0)

    # nn.Parameter(torch.rand(P, C, 1, 1)) -> deterministic uniform [0, 1)
    prototype_tensors = jax.random.uniform(
        k_p, (num_prototypes, latent_channels, 1, 1), dtype=jnp.float32
    )
    x = jax.random.normal(k_x, (B, latent_channels, H, W), dtype=jnp.float32)

    out = prototype_layer_forward(x, prototype_tensors)
    acts = jax.block_until_ready(out["prototype_activations"])

    ref = _reference_forward(x, prototype_tensors)
    assert acts.shape == (B, num_prototypes, H, W), acts.shape
    assert out["upsampled_activation"] is None
    assert jnp.allclose(acts, ref, atol=1e-5, rtol=1e-5), "mismatch vs reference"

    print("KERNEL_OK")
</pallas_src>

<mosaic_0001>
module attributes {stable_mosaic.version = 11 : i64} {
  func.func @_proto_cos_kernel(%arg0: i32, %arg1: i32, %arg2: memref<1x32x256xf32, #tpu.memory_space<vmem>>, %arg3: memref<10x32xf32, #tpu.memory_space<vmem>>, %arg4: memref<1x10x256xf32, #tpu.memory_space<vmem>>) attributes {dimension_semantics = [#tpu.dimension_semantics<parallel>, #tpu.dimension_semantics<parallel>], iteration_bounds = array<i64: 2, 1>, scalar_prefetch = 0 : i64, scratch_operands = 0 : i64, tpu.core_type = #tpu.core_type<tc>, window_params = [{transform_indices = @transform_0, window_bounds = array<i64: 1, 32, 256>}, {pipeline_mode = #tpu.pipeline_mode<synchronous>, transform_indices = @transform_1, window_bounds = array<i64: 10, 32>}, {transform_indices = @transform_2, window_bounds = array<i64: 1, 10, 256>}]} {
    %c0 = arith.constant 0 : index
    %c0_0 = arith.constant 0 : index
    %0 = vector.load %arg3[%c0, %c0_0] : memref<10x32xf32, #tpu.memory_space<vmem>>, vector<10x32xf32>
    %c0_1 = arith.constant 0 : index
    %c0_2 = arith.constant 0 : index
    %c0_3 = arith.constant 0 : index
    %1 = vector.load %arg2[%c0_1, %c0_2, %c0_3] : memref<1x32x256xf32, #tpu.memory_space<vmem>>, vector<1x32x256xf32>
    %2 = vector.shape_cast %1 : vector<1x32x256xf32> to vector<32x256xf32>
    %3 = arith.mulf %2, %2 : vector<32x256xf32>
    %cst = arith.constant dense<0.000000e+00> : vector<256xf32>
    %4 = vector.multi_reduction <add>, %3, %cst [0] : vector<32x256xf32> to vector<256xf32>
    %5 = vector.shape_cast %4 : vector<256xf32> to vector<1x256xf32>
    %cst_4 = arith.constant 1.000000e-24 : f32
    %6 = vector.broadcast %cst_4 : f32 to vector<1x256xf32>
    %7 = arith.maximumf %5, %6 : vector<1x256xf32>
    %8 = math.rsqrt %7 : vector<1x256xf32>
    %cst_5 = arith.constant dense<0.000000e+00> : vector<10x256xf32>
    %9 = tpu.matmul %0, %2, %cst_5 {dimension_numbers = #tpu.dot_dimension_numbers<[1], [0], [0], [1], [0, 0, 1, 1], [], []>} : vector<10x32xf32>, vector<32x256xf32>, vector<10x256xf32> -> vector<10x256xf32>
    %10 = vector.broadcast %8 : vector<1x256xf32> to vector<10x256xf32>
    %11 = arith.mulf %9, %10 : vector<10x256xf32>
    %c0_6 = arith.constant 0 : index
    %c0_7 = arith.constant 0 : index
    %c0_8 = arith.constant 0 : index
    %12 = vector.load %arg4[%c0_6, %c0_7, %c0_8] : memref<1x10x256xf32, #tpu.memory_space<vmem>>, vector<1x10x256xf32>
    %13 = vector.shape_cast %12 : vector<1x10x256xf32> to vector<10x256xf32>
    %14 = vector.shape_cast %11 : vector<10x256xf32> to vector<1x10x256xf32>
    tpu.vector_store %arg4[%c0_6, %c0_7, %c0_8], %14 {strides = array<i32>} : memref<1x10x256xf32, #tpu.memory_space<vmem>>, vector<1x10x256xf32>,
    return
  }
  func.func @transform_0(%arg0: i32, %arg1: i32) -> (i32, i32, i32) {
    %c0_i32 = arith.constant 0 : i32
    %c0_i32_0 = arith.constant 0 : i32
    return %arg0, %c0_i32, %arg1 : i32, i32, i32
  }
  func.func @transform_1(%arg0: i32, %arg1: i32) -> (i32, i32) {
    %c0_i32 = arith.constant 0 : i32
    %c0_i32_0 = arith.constant 0 : i32
    %c0_i32_1 = arith.constant 0 : i32
    return %c0_i32, %c0_i32_0 : i32, i32
  }
  func.func @transform_2(%arg0: i32, %arg1: i32) -> (i32, i32, i32) {
    %c0_i32 = arith.constant 0 : i32
    %c0_i32_0 = arith.constant 0 : i32
    return %arg0, %c0_i32, %arg1 : i32, i32, i32
  }
}

</mosaic_0001>

<llo_original>
// kernel: tpu_custom_call.1
$region0: #{tpu_custom_call.1}
  #allocation0 [shape = 'u32[]', space=smem, size = 0x4, offset = 0x4, fixed_abs, tag = 'smem constant byte address 0x4 - core index']
  #allocation1 [shape = 'u32[144,128]{1,0:T(1,128)}', space=vmem, size = 0x12000, scoped, tag = 'internal scratch']
  %s0 = inlined_call_operand.hbm [shape: f32[2,32,256], index: 0, kind: input, shape index: {}]
  %s1 = inlined_call_operand.hbm [shape: f32[10,32], index: 1, kind: input, shape index: {}]
  %s2 = inlined_call_operand.vmem [shape: f32[2,10,256], index: 2, kind: output, shape index: {}]
  %s3 = sld [smem:[#allocation0]]
  $region49: #{tpu_custom_call.1} parent=0
    _
  %s5 = ssub.s32 1, %s3
  %s6 = scalar_select 0, %s5, %s3
  $region1: #{tpu_custom_call.1} parent=0
    #allocation2 [shape = 'u8[65536]{0}', space=vmem, size = 0x10000, scoped, tag = 'input window, operand 0']
    #allocation3 [shape = 's32[2]{0}', space=sflag, size = 0x8, scoped, tag = 'scoped memory for tpu_custom_call.1']
    #allocation4 [shape = 'u8[8192]{0}', space=vmem, size = 0x2000, scoped, tag = 'input window, operand 1, single buffered']
    #allocation5 [shape = 's32[1]{0}', space=sflag, size = 0x4, scoped, tag = 'scoped memory for tpu_custom_call.1']
    %7 = vsyncpa [#allocation3], 0
    %s8 = scalar_lea.sflag [#allocation3], 1
    %9 = vsyncpa %s8, 0
    %10 = vsyncpa [#allocation5], 0
    loop: start=0, step=1, limit=4
    $region2: #{tpu_custom_call.1} parent=1 // loop_pre_header
      _
    $region3: #{tpu_custom_call.1} parent=1 // loop_header
      %s12 = sphi 0, %s16
      %p13 = scmp.ge.s32.totalorder %s12, 4
      %s19 = sphi 0, %s31
      %s20 = sphi 0, %s27
      %s21 = sphi 0, %s19
      %s22 = sphi 0, %s20
      %s23 = sphi 0, %s21
      %s24 = sphi 0, %s22
      %s36 = sphi 0, %s38
      %s39 = sphi 0, %s36
      %s40 = sphi 0, %s39
      %s56 = sphi 0, %s40
      %s60 = sphi 0, %s60
      %s62 = sphi 0, %s60
      %s63 = sphi 0, %s62
      %s77 = sphi 0, %s63
      %s85 = sphi 0, %s87
      %s88 = sphi 0, %s85
      %s89 = sphi 0, %s88
      %s105 = sphi 0, %s89
    $region4: #{tpu_custom_call.1} parent=1 // loop_header_branch
      %15 = sbr.rel (%p13) target = $region8
    $region5: #{tpu_custom_call.1} parent=1 // loop_body
      %s17 = ssub.s32 %s12, 1
      %s18 = ssub.s32 %s12, 2
      %s25 = sadd.s32 1, %s20
      %p26 = scmp.ge.s32.totalorder %s25, 1
      %s27 = scalar_select %p26, 0, %s25
      %s28 = sadd.s32 1, %s19
      %s29 = scalar_select %p26, %s28, %s19
      %p30 = scmp.ge.s32.totalorder %s29, 2
      %s31 = scalar_select %p30, 0, %s29
      %s32 = ssub.s32 %s19, %s31
      %s33 = ssub.s32 %s20, %s27
      %s34 = sor.u32 %s32, %s33
      %p35 = scmp.eq.s32.totalorder %s34, 0
      %s37 = sadd.s32 %s36, 1
      %s38 = scalar_select %p35, %s36, %s37
      %p41 = pneg %p35
      %p42 = scmp.eq.s32.totalorder %s12, 1
      %p43 = por %p41, %p42
      %p44 = scmp.ne.s32.totalorder %s36, %s39
      %p45 = scmp.eq.s32.totalorder %s12, 0
      %p46 = por %p44, %p45
      %p47 = scmp.ne.s32.totalorder %s36, %s39
      %p48 = scmp.eq.s32.totalorder %s17, 1
      %p49 = por %p47, %p48
      %p50 = scmp.ne.s32.totalorder %s39, %s40
      %p51 = scmp.eq.s32.totalorder %s17, 0
      %p52 = por %p50, %p51
      %p53 = scmp.ne.s32.totalorder %s39, %s40
      %p54 = scmp.eq.s32.totalorder %s18, 1
      %p55 = por %p53, %p54
      %p57 = scmp.ne.s32.totalorder %s40, %s56
      %p58 = scmp.eq.s32.totalorder %s18, 0
      %p59 = por %p57, %p58
      %s61 = sadd.s32 %s60, 1
      %p64 = scmp.eq.s32.totalorder %s12, 1
      %p65 = scmp.ne.s32.totalorder %s60, %s62
      %p66 = scmp.eq.s32.totalorder %s12, 0
      %p67 = por %p65, %p66
      %p68 = scmp.ne.s32.totalorder %s60, %s62
      %p69 = scmp.eq.s32.totalorder %s17, 1
      %p70 = por %p68, %p69
      %p71 = scmp.ne.s32.totalorder %s62, %s63
      %p72 = scmp.eq.s32.totalorder %s17, 0
      %p73 = por %p71, %p72
      %p74 = scmp.ne.s32.totalorder %s62, %s63
      %p75 = scmp.eq.s32.totalorder %s18, 1
      %p76 = por %p74, %p75
      %p78 = scmp.ne.s32.totalorder %s63, %s77
      %p79 = scmp.eq.s32.totalorder %s18, 0
      %p80 = por %p78, %p79
      %s81 = ssub.s32 %s19, %s31
      %s82 = ssub.s32 %s20, %s27
      %s83 = sor.u32 %s81, %s82
      %p84 = scmp.eq.s32.totalorder %s83, 0
      %s86 = sadd.s32 %s85, 1
      %s87 = scalar_select %p84, %s85, %s86
      %p90 = pneg %p84
      %p91 = scmp.eq.s32.totalorder %s12, 1
      %p92 = por %p90, %p91
      %p93 = scmp.ne.s32.totalorder %s85, %s88
      %p94 = scmp.eq.s32.totalorder %s12, 0
      %p95 = por %p93, %p94
      %p96 = scmp.ne.s32.totalorder %s85, %s88
      %p97 = scmp.eq.s32.totalorder %s17, 1
      %p98 = por %p96, %p97
      %p99 = scmp.ne.s32.totalorder %s88, %s89
      %p100 = scmp.eq.s32.totalorder %s17, 0
      %p101 = por %p99, %p100
      %p102 = scmp.ne.s32.totalorder %s88, %s89
      %p103 = scmp.eq.s32.totalorder %s18, 1
      %p104 = por %p102, %p103
      %p106 = scmp.ne.s32.totalorder %s89, %s105
      %p107 = scmp.eq.s32.totalorder %s18, 0
      %p108 = por %p106, %p107
      %p109 = scmp.le.s32.totalorder 1, %s12
      %p110 = scmp.lt.s32.totalorder %s12, 3
      %p111 = pnand %p109, %p110
      %p112 = pneg %p111
      // Predicated region
      $region9: #{tpu_custom_call.1} parent=5 // pred_check
        _
      $region10: #{tpu_custom_call.1} parent=5 // pred_check_branch
        %114 = sbr.rel (%p111) target = $region12
      $region11: #{tpu_custom_call.1} parent=5 // pred_region
        %s115 = ssub.s32 %s12, 1
        // Predicated region
        $region13: #{tpu_custom_call.1} parent=11 // pred_check
          %p116 = pneg %p73
        $region14: #{tpu_custom_call.1} parent=11 // pred_check_branch
          %118 = sbr.rel (%p116) target = $region16
        $region15: #{tpu_custom_call.1} parent=11 // pred_region
          %s120 = ssub.s32 256, 256
          %121 = vsyncadd [#allocation5], %s120
          %s122 = sshll.u32 [#allocation4], 4
          %s123 = int_to_ptr.vmem [resolvable:$true] %s122
          %128 = dma.hbm_to_vmem [thread:$0]  %s1, 256, %s123, [#allocation5], 128, 128, 8
        $region16: #{tpu_custom_call.1} parent=11 // pred_fallthru
          _
      $region12: #{tpu_custom_call.1} parent=5 // pred_fallthru
        _
      %p129 = scmp.lt.s32.totalorder %s12, 2
      // Predicated region
      $region17: #{tpu_custom_call.1} parent=5 // pred_check
        %p130 = pneg %p129
      $region18: #{tpu_custom_call.1} parent=5 // pred_check_branch
        %132 = sbr.rel (%p130) target = $region20
      $region19: #{tpu_custom_call.1} parent=5 // pred_region
        // Predicated region
        $region21: #{tpu_custom_call.1} parent=19 // pred_check
          %p133 = pneg %p46
        $region22: #{tpu_custom_call.1} parent=19 // pred_check_branch
          %135 = sbr.rel (%p133) target = $region24
        $region23: #{tpu_custom_call.1} parent=19 // pred_region
          %s136 = sand.u32 %s36, 1
          %s137 = scalar_lea.sflag [#allocation3], %s136
          %s138 = sand.u32 %s36, 1
          %s139 = smul.addr %s138, 64
          %s140 = scalar_lea.vmem [#allocation2], %s139
          %s141 = smul.u32 2, %s20
          %s143 = ssub.s32 1024, 1024
          %144 = vsyncadd %s137, %s143
          %s145 = smul.addr %s19, 8
          %s146 = sadd.s32 %s141, %s145
          %s147 = smul.addr %s146, 128
          %s148 = scalar_lea.hbm %s0, %s147
          %s149 = sshll.u32 %s140, 4
          %s150 = int_to_ptr.vmem [resolvable:$true] %s149
          %155 = dma.hbm_to_vmem [thread:$0]  %s148, 1024, %s150, %s137, 256, 256, 16
        $region24: #{tpu_custom_call.1} parent=19 // pred_fallthru
          _
      $region20: #{tpu_custom_call.1} parent=5 // pred_fallthru
        _
      %p156 = scmp.le.s32.totalorder 1, %s12
      %p157 = scmp.lt.s32.totalorder %s12, 3
      %p158 = pnand %p156, %p157
      %p159 = pneg %p158
      // Predicated region
      $region25: #{tpu_custom_call.1} parent=5 // pred_check
        _
      $region26: #{tpu_custom_call.1} parent=5 // pred_check_branch
        %161 = sbr.rel (%p158) target = $region28
      $region27: #{tpu_custom_call.1} parent=5 // pred_region
        %s162 = ssub.s32 %s12, 1
        %s163 = sand.u32 %s39, 1
        %s164 = scalar_lea.sflag [#allocation3], %s163
        %s165 = sand.u32 %s39, 1
        %s166 = smul.addr %s165, 64
        %s167 = scalar_lea.vmem [#allocation2], %s166
        // Predicated region
        $region29: #{tpu_custom_call.1} parent=27 // pred_check
          %p168 = pneg %p52
        $region30: #{tpu_custom_call.1} parent=27 // pred_check_branch
          %170 = sbr.rel (%p168) target = $region32
        $region31: #{tpu_custom_call.1} parent=27 // pred_region
          %171 = dma.done %s164, 1024
        $region32: #{tpu_custom_call.1} parent=27 // pred_fallthru
          _
        // Predicated region
        $region33: #{tpu_custom_call.1} parent=27 // pred_check
          %p172 = pneg %p73
        $region34: #{tpu_custom_call.1} parent=27 // pred_check_branch
          %174 = sbr.rel (%p172) target = $region36
        $region35: #{tpu_custom_call.1} parent=27 // pred_region
          %175 = dma.done [#allocation5], 256
        $region36: #{tpu_custom_call.1} parent=27 // pred_fallthru
          _
        %s176 = sand.u32 %s39, 1
        %s177 = scalar_lea.sflag [#allocation3], %s176
        %s178 = sand.u32 %s39, 1
        %s179 = smul.addr %s178, 64
        %s180 = scalar_lea.vmem [#allocation2], %s179
        %p181 = pneg %p52
        %p182 = pneg %p49
        %p183 = pneg %p73
        %p184 = pneg %p70
        %p185 = pneg %p101
        %p186 = pneg %p98
        %s187 = smul.u32 2, %s22
        %p188 = scmp.lt.s32.totalorder %s21, 1
        %s189 = scalar_select %p188, %s21, 1
        %p190 = scmp.lt.s32.totalorder %s187, 1
        %s191 = scalar_select %p190, %s187, 1
        %s192 = smul.addr %s189, 4
        %s193 = sadd.s32 %s191, %s192
        %s194 = smul.addr %s193, 8
        %s195 = scalar_lea.vmem %s2, %s194
        %s196 = smul.u32 2, %s22
        %s197 = smul.u32 2, %s22
        %p198 = scmp.lt.s32.totalorder %s21, 1
        %s199 = scalar_select %p198, %s21, 1
        %p200 = scmp.lt.s32.totalorder %s197, 1
        %s201 = scalar_select %p200, %s197, 1
        %s202 = smul.addr %s199, 4
        %s203 = sadd.s32 %s201, %s202
        %s204 = smul.addr %s203, 8
        %s205 = scalar_lea.vmem %s2, %s204
        %s206 = smul.u32 2, %s22
        %v207 = vld [vmem:[#allocation4] sm:$0xff]
        %v208 = vld [vmem:[#allocation4 + $0x8] sm:$0x3]
        %v209 = vld [vmem:[%s167] sm:$0xff]
        %v210 = vld [vmem:[%s167 + $0x8] sm:$0xff]
        %v211 = vld [vmem:[%s167 + $0x10] sm:$0xff]
        %v212 = vld [vmem:[%s167 + $0x18] sm:$0xff]
        %v213 = vld [vmem:[%s167 + $0x20] sm:$0xff]
        %v214 = vld [vmem:[%s167 + $0x28] sm:$0xff]
        %v215 = vld [vmem:[%s167 + $0x30] sm:$0xff]
        %v216 = vld [vmem:[%s167 + $0x38] sm:$0xff]
        %v217 = vmul.f32 %v209, %v209
        %v218 = vmul.f32 %v210, %v210
        %v219 = vmul.f32 %v211, %v211
        %v220 = vmul.f32 %v212, %v212
        %v221 = vmul.f32 %v213, %v213
        %v222 = vmul.f32 %v214, %v214
        %v223 = vmul.f32 %v215, %v215
        %v224 = vmul.f32 %v216, %v216
        %v225 = vadd.f32 %v217, %v219
        %v226 = vadd.f32 %v225, %v221
        %v227 = vadd.f32 %v226, %v223
        %v228 = vrot.slane %v227, 4
        %v229 = vadd.f32 %v227, %v228
        %v230 = vrot.slane %v229, 2
        %v231 = vadd.f32 %v229, %v230
        %v232 = vrot.slane %v231, 1
        %v233 = vadd.f32 %v231, %v232
        %v234 = vadd.f32 %v218, %v220
        %v235 = vadd.f32 %v234, %v222
        %v236 = vadd.f32 %v235, %v224
        %v237 = vrot.slane %v236, 4
        %v238 = vadd.f32 %v236, %v237
        %v239 = vrot.slane %v238, 2
        %v240 = vadd.f32 %v238, %v239
        %v241 = vrot.slane %v240, 1
        %v242 = vadd.f32 %v240, %v241
        %v243 = vmax.f32 %v233, 1e-24
        %v244 = vmax.f32 %v242, 1e-24
        %v245 = vrsqrt.pop %v243
        %v246 = vrsqrt.pop %v244
        %vm247 = vcmask 261120
        %v249 = vsel %vm247, %v207, 0
        %v252 = vsel %vm247, %v208, 0
        %254 = vmatprep.subr.mxu0 0.0
        %255 = vmatpush1.msra.mxu0 0.0
        %256 = vmatprep.subr.mxu0 0.0
        %257 = vmatpush1.msra.mxu0 0.0
        %258 = vmatprep.subr.mxu0 0.0
        %259 = vmatpush1.msra.mxu0 0.0
        %260 = vmatprep.subr.mxu0 0.0
        %261 = vmatpush1.msra.mxu0 0.0
        %262 = vmatprep.subr.mxu0 0.0
        %263 = vmatpush1.msra.mxu0 0.0
        %264 = vmatprep.subr.mxu0 0.0
        %265 = vmatpush1.msra.mxu0 0.0
        %266 = vmatprep.subr.mxu0 0.0
        %267 = vmatpush1.msra.mxu0 0.0
        %268 = vmatprep.subr.mxu0 0.0
        %269 = vmatpush1.msra.mxu0 0.0
        %270 = vmatprep.subr.mxu0 0.0
        %271 = vmatpush1.msra.mxu0 0.0
        %272 = vmatprep.subr.mxu0 0.0
        %273 = vmatpush1.msra.mxu0 0.0
        %274 = vmatprep.subr.mxu0 0.0
        %275 = vmatpush1.msra.mxu0 0.0
        %276 = vmatprep.subr.mxu0 0.0
        %277 = vmatpush1.msra.mxu0 0.0
        %278 = vmatprep.subr.mxu0 %v216
        %279 = vmatpush1.msra.mxu0 %v215
        %280 = vmatprep.subr.mxu0 %v214
        %281 = vmatpush1.msra.mxu0 %v213
        %282 = vmatprep.subr.mxu0 %v212
        %283 = vmatpush1.msra.mxu0 %v211
        %284 = vmatprep.subr.mxu0 %v210
        %285 = vmatpush1.msra.mxu0 %v209
        %286 = vmatprep.subr.mxu0 0.0
        %287 = vmatpush2.msra.mxu0 0.0
        %288 = vmatprep.subr.mxu0 0.0
        %289 = vmatpush2.msra.mxu0 0.0
        %290 = vmatprep.subr.mxu0 0.0
        %291 = vmatpush2.msra.mxu0 0.0
        %292 = vmatprep.subr.mxu0 0.0
        %293 = vmatpush2.msra.mxu0 0.0
        %294 = vmatprep.subr.mxu0 0.0
        %295 = vmatpush2.msra.mxu0 0.0
        %296 = vmatprep.subr.mxu0 0.0
        %297 = vmatpush2.msra.mxu0 0.0
        %298 = vmatprep.subr.mxu0 0.0
        %299 = vmatpush2.msra.mxu0 0.0
        %300 = vmatprep.subr.mxu0 0.0
        %301 = vmatpush2.msra.mxu0 0.0
        %302 = vmatprep.subr.mxu0 0.0
        %303 = vmatpush2.msra.mxu0 0.0
        %304 = vmatprep.subr.mxu0 0.0
        %305 = vmatpush2.msra.mxu0 0.0
        %306 = vmatprep.subr.mxu0 0.0
        %307 = vmatpush2.msra.mxu0 0.0
        %308 = vmatprep.subr.mxu0 0.0
        %309 = vmatpush2.msra.mxu0 0.0
        %310 = vmatprep.subr.mxu0 0.0
        %311 = vmatpush2.msra.mxu0 0.0
        %312 = vmatprep.subr.mxu0 0.0
        %313 = vmatpush2.msra.mxu0 0.0
        %314 = vmatprep.subr.mxu0 0.0
        %315 = vmatpush2.msra.mxu0 0.0
        %316 = vmatprep.subr.mxu0 0.0
        %317 = vmatpush2.msra.mxu0 0.0
        %318 = vmatprep.mubr.f32.mxu0 0.0
        %319 = vmatmul.mubr.f32.gmra.mxu0 %v249
        %v320 = vpop.f32.mrf.mxu0
        %v321 = vadd.f32 0.0, %v320
        %v322 = vpop.f32.mrf.mxu0
        %v323 = vadd.f32 0.0, %v322
        %324 = vmatprep.mubr.f32.mxu0 0.0
        %325 = vmatmul.mubr.f32.gmra.mxu0 %v252
        %v326 = vpop.f32.mrf.mxu0
        %v327 = vadd.f32 0.0, %v326
        %v328 = vpop.f32.mrf.mxu0
        %v329 = vadd.f32 0.0, %v328
        %330 = vdwg.mxu0
        %v331 = vmul.f32 %v321, %v245
        %v332 = vmul.f32 %v323, %v246
        %v333 = vmul.f32 %v327, %v245
        %v334 = vmul.f32 %v329, %v246
        %335 = vst [vmem:[%s205] sm:$0xff] %v331
        %336 = vst [vmem:[%s205 + $0x8] sm:$0xff] %v332
        %337 = vst [vmem:[%s205 + $0x10] sm:$0x3] %v333
        %338 = vst [vmem:[%s205 + $0x18] sm:$0x3] %v334
        %s339 = smul.u32 2, %s22
        %p340 = scmp.lt.s32.totalorder %s21, 1
        %s341 = scalar_select %p340, %s21, 1
        %p342 = scmp.lt.s32.totalorder %s339, 1
        %s343 = scalar_select %p342, %s339, 1
        %s344 = smul.addr %s341, 4
        %s345 = sadd.s32 %s343, %s344
        %s346 = smul.addr %s345, 8
        %s347 = scalar_lea.vmem %s2, %s346
        // Predicated region
        $region37: #{tpu_custom_call.1} parent=27 // pred_check
          %p348 = pneg %p98
        $region38: #{tpu_custom_call.1} parent=27 // pred_check_branch
          %350 = sbr.rel (%p348) target = $region40
        $region39: #{tpu_custom_call.1} parent=27 // pred_region
          %s351 = smul.u32 2, %s22
        $region40: #{tpu_custom_call.1} parent=27 // pred_fallthru
          _
      $region28: #{tpu_custom_call.1} parent=5 // pred_fallthru
        _
      %p352 = scmp.le.s32.totalorder 2, %s12
      // Predicated region
      $region41: #{tpu_custom_call.1} parent=5 // pred_check
        %p353 = pneg %p352
      $region42: #{tpu_custom_call.1} parent=5 // pred_check_branch
        %355 = sbr.rel (%p353) target = $region44
      $region43: #{tpu_custom_call.1} parent=5 // pred_region
        %s356 = ssub.s32 %s12, 2
        // Predicated region
        $region45: #{tpu_custom_call.1} parent=43 // pred_check
          %p357 = pneg %p104
        $region46: #{tpu_custom_call.1} parent=43 // pred_check_branch
          %359 = sbr.rel (%p357) target = $region48
        $region47: #{tpu_custom_call.1} parent=43 // pred_region
          %s360 = smul.u32 2, %s24
          %p361 = scmp.lt.s32.totalorder %s23, 1
          %s362 = scalar_select %p361, %s23, 1
          %p363 = scmp.lt.s32.totalorder %s360, 1
          %s364 = scalar_select %p363, %s360, 1
          %s365 = smul.addr %s362, 4
          %s366 = sadd.s32 %s364, %s365
          %s367 = smul.addr %s366, 8
          %s368 = scalar_lea.vmem %s2, %s367
        $region48: #{tpu_custom_call.1} parent=43 // pred_fallthru
          _
      $region44: #{tpu_custom_call.1} parent=5 // pred_fallthru
        _
    $region6: #{tpu_custom_call.1} parent=1 // loop_footer
      %s16 = sadd.s32 1, %s12
    $region7: #{tpu_custom_call.1} parent=1 // loop_footer_branch
      %11 = sbr.rel target = $region3
    $region8: #{tpu_custom_call.1} parent=1 // loop_exit
      _
    %369 = vsyncpa [#allocation3], 1
    %s370 = scalar_lea.sflag [#allocation3], 1
    %371 = vsyncpa %s370, 1
    %372 = vsyncpa [#allocation5], 1

</llo_original>
